<compile_context>
chip_gen: v6e
topology: v6e:2x2x1
jax: 0.10.0
libtpu: 0.0.40
codegen_flags: <defaults>
</compile_context>

<pallas_src>
import functools

import jax
import jax.numpy as jnp
from jax.experimental import pallas as pl
from jax.experimental.pallas import tpu as pltpu

_SUBLANE = 8


def _round_up(n, m):
    return (n + m - 1) // m * m


def mlp_kernel(x_ref,
               w1_ref, b1_ref,
               w2_ref, b2_ref,
               w3_ref, b3_ref,
               w4_ref, b4_ref,
               o_ref):
    """Fused 4-layer MLP forward for one batch tile.

    All weights/biases are resident in VMEM (tiny, replicated across the batch
    grid). Matmul operands are bf16 (fast MXU path); accumulation, bias add
    and ReLU are in f32. Dropout = identity (eval mode).
    """
    # In-kernel f32 -> bf16 cast of the streamed input tile (free VPU filler).
    x = x_ref[...].astype(jnp.bfloat16)

    # l1 + ReLU
    h = jnp.dot(x, w1_ref[...], preferred_element_type=jnp.float32)
    h = jnp.maximum(h + b1_ref[...], 0.0).astype(jnp.bfloat16)

    # l2 + ReLU
    h = jnp.dot(h, w2_ref[...], preferred_element_type=jnp.float32)
    h = jnp.maximum(h + b2_ref[...], 0.0).astype(jnp.bfloat16)

    # l3 + ReLU
    h = jnp.dot(h, w3_ref[...], preferred_element_type=jnp.float32)
    h = jnp.maximum(h + b3_ref[...], 0.0).astype(jnp.bfloat16)

    # l4 (no activation)
    out = jnp.dot(h, w4_ref[...], preferred_element_type=jnp.float32) + b4_ref[...]
    o_ref[...] = out.astype(o_ref.dtype)


def prepare_params(params):
    """One-time (non-jit, per-model) conversion: bf16 weights, f32 (1,d) biases.

    Hoisted out of the jitted forward so no convert/pad XLA ops run per call.
    """
    prepared = {}
    for idx in range(1, 5):
        prepared[f"w{idx}"] = jnp.asarray(params[f"w{idx}"], jnp.bfloat16)
        prepared[f"b{idx}"] = jnp.asarray(params[f"b{idx}"],
                                          jnp.float32).reshape(1, -1)
    return prepared


def _choose_block_b(B, block_b):
    """Batch tile: multiple of 8 sublanes, capped so the grid has >=2 steps."""
    bb = min(block_b, _round_up(B, _SUBLANE))
    if B > _SUBLANE:
        # v7x has 2 TensorCores; keep at least 2 "parallel" grid steps.
        bb = min(bb, _round_up(pl.cdiv(B, 2), _SUBLANE))
    return max(_SUBLANE, _round_up(bb, _SUBLANE))


@functools.partial(jax.jit, static_argnames=("block_b",))
def simple_model_forward(x, prepared, block_b=1024):
    """x: (B, input_shape) float32. prepared: output of prepare_params()."""
    B, f_in = x.shape
    d1 = prepared["w1"].shape[1]
    d2 = prepared["w2"].shape[1]
    d3 = prepared["w3"].shape[1]
    f_out = prepared["w4"].shape[1]

    bb = _choose_block_b(B, block_b)
    grid = (pl.cdiv(B, bb),)  # ragged last block handled by Pallas (masked writes)

    # Weights/biases are tiny (~100 KB in bf16) -> one full block each,
    # replicated across the batch grid (constant index_map => DMA'd once).
    def rep2(shape):
        return pl.BlockSpec(shape, lambda i: (0, 0))

    out = pl.pallas_call(
        mlp_kernel,
        out_shape=jax.ShapeDtypeStruct((B, f_out), jnp.float32),
        grid_spec=pltpu.PrefetchScalarGridSpec(
            num_scalar_prefetch=0,
            grid=grid,
            in_specs=[
                pl.BlockSpec((bb, f_in), lambda i: (i, 0)),     # x tile (f32)
                rep2((f_in, d1)), rep2((1, d1)),                # l1
                rep2((d1, d2)),   rep2((1, d2)),                # l2
                rep2((d2, d3)),   rep2((1, d3)),                # l3
                rep2((d3, f_out)), rep2((1, f_out)),            # l4
            ],
            # Unpadded output block: f_out equals the full last dim, so no 128
            # lane pad / post-slice; masked stores are fine (DMA-bound kernel).
            out_specs=pl.BlockSpec((bb, f_out), lambda i: (i, 0)),
        ),
        compiler_params=pltpu.CompilerParams(
            dimension_semantics=("parallel",),
        ),
    )(x,
      prepared["w1"], prepared["b1"],
      prepared["w2"], prepared["b2"],
      prepared["w3"], prepared["b3"],
      prepared["w4"], prepared["b4"])

    return out


def init_params(key, input_shape, output_shape):
    """Deterministic init mimicking PyTorch nn.Linear default U(-1/sqrt(fan_in), 1/sqrt(fan_in))."""
    dims = [(input_shape, 64), (64, 256), (256, 128), (128, output_shape)]
    params = {}
    for idx, (fi, fo) in enumerate(dims, start=1):
        key, kw, kb = jax.random.split(key, 3)
        bound = 1.0 / (fi ** 0.5)
        params[f"w{idx}"] = jax.random.uniform(
            kw, (fi, fo), jnp.float32, minval=-bound, maxval=bound)
        params[f"b{idx}"] = jax.random.uniform(
            kb, (1, fo), jnp.float32, minval=-bound, maxval=bound)
    return params


def reference_forward(x, params):
    """Plain-JAX f32 reference (eval mode: dropout = identity)."""
    h = jax.nn.relu(x @ params["w1"] + params["b1"])
    h = jax.nn.relu(h @ params["w2"] + params["b2"])
    h = jax.nn.relu(h @ params["w3"] + params["b3"])
    return h @ params["w4"] + params["b4"]


def reference_forward_bf16(x, params):
    """Reference matching the kernel's numerics (bf16 operands, f32 accumulation)."""
    bf = jnp.bfloat16
    h = jnp.dot(x.astype(bf), params["w1"].astype(bf),
                preferred_element_type=jnp.float32) + params["b1"]
    h = jnp.maximum(h, 0.0).astype(bf)
    h = jnp.dot(h, params["w2"].astype(bf),
                preferred_element_type=jnp.float32) + params["b2"]
    h = jnp.maximum(h, 0.0).astype(bf)
    h = jnp.dot(h, params["w3"].astype(bf),
                preferred_element_type=jnp.float32) + params["b3"]
    h = jnp.maximum(h, 0.0).astype(bf)
    return jnp.dot(h, params["w4"].astype(bf),
                   preferred_element_type=jnp.float32) + params["b4"]


def _check(out, ref_matched, ref_f32):
    # Tight check against the bf16-matched reference (same numerics as kernel).
    assert jnp.allclose(out, ref_matched, atol=1e-2, rtol=1e-2), \
        "mismatch vs bf16-matched reference"
    # Loose semantic check against the pure-f32 reference (bf16 rounding only).
    rel = jnp.max(jnp.abs(out - ref_f32)) / (jnp.max(jnp.abs(ref_f32)) + 1e-12)
    assert float(rel) < 5e-2, f"relative error vs f32 reference too large: {float(rel)}"


if __name__ == "__main__":
    INPUT_SHAPE = 32   # model's input feature dim
    OUTPUT_SHAPE = 16  # model's output feature dim

    key = jax.random.PRNGKey(0)
    key, kp = jax.random.split(key)
    params = init_params(kp, INPUT_SHAPE, OUTPUT_SHAPE)
    prepared = prepare_params(params)   # hoisted bf16/f32 conversion

    # Case 1: batch divisible by the tile; bb is capped so grid has 2 steps
    # (exercises megacore "parallel" sharding on v7x).
    key, k1 = jax.random.split(key)
    x1 = jax.random.normal(k1, (64, INPUT_SHAPE), dtype=jnp.float32)
    out1 = jax.block_until_ready(simple_model_forward(x1, prepared))
    assert out1.shape == (64, OUTPUT_SHAPE)
    _check(out1, reference_forward_bf16(x1, params), reference_forward(x1, params))

    # Case 2: ragged batch (exercises Pallas's partial last block: padded
    # reads, masked writes — no wrapper-side jnp.pad / post-slice).
    key, k2 = jax.random.split(key)
    x2 = jax.random.normal(k2, (100, INPUT_SHAPE), dtype=jnp.float32)
    out2 = jax.block_until_ready(simple_model_forward(x2, prepared))
    assert out2.shape == (100, OUTPUT_SHAPE)
    _check(out2, reference_forward_bf16(x2, params), reference_forward(x2, params))

    print("KERNEL_OK")
</pallas_src>

<mosaic_0001>
module attributes {stable_mosaic.version = 11 : i64} {
  func.func @mlp_kernel(%arg0: i32, %arg1: memref<32x32xf32, #tpu.memory_space<vmem>>, %arg2: memref<32x64xbf16, #tpu.memory_space<vmem>>, %arg3: memref<1x64xf32, #tpu.memory_space<vmem>>, %arg4: memref<64x256xbf16, #tpu.memory_space<vmem>>, %arg5: memref<1x256xf32, #tpu.memory_space<vmem>>, %arg6: memref<256x128xbf16, #tpu.memory_space<vmem>>, %arg7: memref<1x128xf32, #tpu.memory_space<vmem>>, %arg8: memref<128x16xbf16, #tpu.memory_space<vmem>>, %arg9: memref<1x16xf32, #tpu.memory_space<vmem>>, %arg10: memref<32x16xf32, #tpu.memory_space<vmem>>) attributes {dimension_semantics = [#tpu.dimension_semantics<parallel>], iteration_bounds = array<i64: 2>, scalar_prefetch = 0 : i64, scratch_operands = 0 : i64, tpu.core_type = #tpu.core_type<tc>, window_params = [{transform_indices = @transform_0, window_bounds = array<i64: 32, 32>}, {pipeline_mode = #tpu.pipeline_mode<synchronous>, transform_indices = @transform_1, window_bounds = array<i64: 32, 64>}, {pipeline_mode = #tpu.pipeline_mode<synchronous>, transform_indices = @transform_2, window_bounds = array<i64: 1, 64>}, {pipeline_mode = #tpu.pipeline_mode<synchronous>, transform_indices = @transform_3, window_bounds = array<i64: 64, 256>}, {pipeline_mode = #tpu.pipeline_mode<synchronous>, transform_indices = @transform_4, window_bounds = array<i64: 1, 256>}, {pipeline_mode = #tpu.pipeline_mode<synchronous>, transform_indices = @transform_5, window_bounds = array<i64: 256, 128>}, {pipeline_mode = #tpu.pipeline_mode<synchronous>, transform_indices = @transform_6, window_bounds = array<i64: 1, 128>}, {pipeline_mode = #tpu.pipeline_mode<synchronous>, transform_indices = @transform_7, window_bounds = array<i64: 128, 16>}, {pipeline_mode = #tpu.pipeline_mode<synchronous>, transform_indices = @transform_8, window_bounds = array<i64: 1, 16>}, {transform_indices = @transform_9, window_bounds = array<i64: 32, 16>}]} {
    %c0 = arith.constant 0 : index
    %c0_0 = arith.constant 0 : index
    %0 = vector.load %arg1[%c0, %c0_0] : memref<32x32xf32, #tpu.memory_space<vmem>>, vector<32x32xf32>
    %1 = arith.truncf %0 : vector<32x32xf32> to vector<32x32xbf16>
    %c0_1 = arith.constant 0 : index
    %c0_2 = arith.constant 0 : index
    %2 = vector.load %arg2[%c0_1, %c0_2] : memref<32x64xbf16, #tpu.memory_space<vmem>>, vector<32x64xbf16>
    %cst = arith.constant dense<0.000000e+00> : vector<32x64xf32>
    %3 = tpu.matmul %1, %2, %cst {dimension_numbers = #tpu.dot_dimension_numbers<[1], [0], [0], [1], [0, 0, 1, 1], [], []>} : vector<32x32xbf16>, vector<32x64xbf16>, vector<32x64xf32> -> vector<32x64xf32>
    %c0_3 = arith.constant 0 : index
    %c0_4 = arith.constant 0 : index
    %4 = vector.load %arg3[%c0_3, %c0_4] : memref<1x64xf32, #tpu.memory_space<vmem>>, vector<1x64xf32>
    %5 = vector.broadcast %4 : vector<1x64xf32> to vector<32x64xf32>
    %6 = arith.addf %3, %5 : vector<32x64xf32>
    %cst_5 = arith.constant 0.000000e+00 : f32
    %7 = vector.broadcast %cst_5 : f32 to vector<32x64xf32>
    %8 = arith.maximumf %6, %7 : vector<32x64xf32>
    %9 = arith.truncf %8 : vector<32x64xf32> to vector<32x64xbf16>
    %c0_6 = arith.constant 0 : index
    %c0_7 = arith.constant 0 : index
    %10 = vector.load %arg4[%c0_6, %c0_7] : memref<64x256xbf16, #tpu.memory_space<vmem>>, vector<64x256xbf16>
    %cst_8 = arith.constant dense<0.000000e+00> : vector<32x256xf32>
    %11 = tpu.matmul %9, %10, %cst_8 {dimension_numbers = #tpu.dot_dimension_numbers<[1], [0], [0], [1], [0, 0, 1, 1], [], []>} : vector<32x64xbf16>, vector<64x256xbf16>, vector<32x256xf32> -> vector<32x256xf32>
    %c0_9 = arith.constant 0 : index
    %c0_10 = arith.constant 0 : index
    %12 = vector.load %arg5[%c0_9, %c0_10] : memref<1x256xf32, #tpu.memory_space<vmem>>, vector<1x256xf32>
    %13 = vector.broadcast %12 : vector<1x256xf32> to vector<32x256xf32>
    %14 = arith.addf %11, %13 : vector<32x256xf32>
    %cst_11 = arith.constant 0.000000e+00 : f32
    %15 = vector.broadcast %cst_11 : f32 to vector<32x256xf32>
    %16 = arith.maximumf %14, %15 : vector<32x256xf32>
    %17 = arith.truncf %16 : vector<32x256xf32> to vector<32x256xbf16>
    %c0_12 = arith.constant 0 : index
    %c0_13 = arith.constant 0 : index
    %18 = vector.load %arg6[%c0_12, %c0_13] : memref<256x128xbf16, #tpu.memory_space<vmem>>, vector<256x128xbf16>
    %cst_14 = arith.constant dense<0.000000e+00> : vector<32x128xf32>
    %19 = tpu.matmul %17, %18, %cst_14 {dimension_numbers = #tpu.dot_dimension_numbers<[1], [0], [0], [1], [0, 0, 1, 1], [], []>} : vector<32x256xbf16>, vector<256x128xbf16>, vector<32x128xf32> -> vector<32x128xf32>
    %c0_15 = arith.constant 0 : index
    %c0_16 = arith.constant 0 : index
    %20 = vector.load %arg7[%c0_15, %c0_16] : memref<1x128xf32, #tpu.memory_space<vmem>>, vector<1x128xf32>
    %21 = vector.broadcast %20 : vector<1x128xf32> to vector<32x128xf32>
    %22 = arith.addf %19, %21 : vector<32x128xf32>
    %cst_17 = arith.constant 0.000000e+00 : f32
    %23 = vector.broadcast %cst_17 : f32 to vector<32x128xf32>
    %24 = arith.maximumf %22, %23 : vector<32x128xf32>
    %25 = arith.truncf %24 : vector<32x128xf32> to vector<32x128xbf16>
    %c0_18 = arith.constant 0 : index
    %c0_19 = arith.constant 0 : index
    %26 = vector.load %arg8[%c0_18, %c0_19] : memref<128x16xbf16, #tpu.memory_space<vmem>>, vector<128x16xbf16>
    %cst_20 = arith.constant dense<0.000000e+00> : vector<32x16xf32>
    %27 = tpu.matmul %25, %26, %cst_20 {dimension_numbers = #tpu.dot_dimension_numbers<[1], [0], [0], [1], [0, 0, 1, 1], [], []>} : vector<32x128xbf16>, vector<128x16xbf16>, vector<32x16xf32> -> vector<32x16xf32>
    %c0_21 = arith.constant 0 : index
    %c0_22 = arith.constant 0 : index
    %28 = vector.load %arg9[%c0_21, %c0_22] : memref<1x16xf32, #tpu.memory_space<vmem>>, vector<1x16xf32>
    %29 = vector.broadcast %28 : vector<1x16xf32> to vector<32x16xf32>
    %30 = arith.addf %27, %29 : vector<32x16xf32>
    %c0_23 = arith.constant 0 : index
    %c0_24 = arith.constant 0 : index
    %31 = vector.load %arg10[%c0_23, %c0_24] : memref<32x16xf32, #tpu.memory_space<vmem>>, vector<32x16xf32>
    tpu.vector_store %arg10[%c0_23, %c0_24], %30 {strides = array<i32>} : memref<32x16xf32, #tpu.memory_space<vmem>>, vector<32x16xf32>,
    return
  }
  func.func @transform_0(%arg0: i32) -> (i32, i32) {
    %c0_i32 = arith.constant 0 : i32
    %c0_i32_0 = arith.constant 0 : i32
    return %arg0, %c0_i32 : i32, i32
  }
  func.func @transform_1(%arg0: i32) -> (i32, i32) {
    %c0_i32 = arith.constant 0 : i32
    %c0_i32_0 = arith.constant 0 : i32
    %c0_i32_1 = arith.constant 0 : i32
    return %c0_i32, %c0_i32_0 : i32, i32
  }
  func.func @transform_2(%arg0: i32) -> (i32, i32) {
    %c0_i32 = arith.constant 0 : i32
    %c0_i32_0 = arith.constant 0 : i32
    %c0_i32_1 = arith.constant 0 : i32
    return %c0_i32, %c0_i32_0 : i32, i32
  }
  func.func @transform_3(%arg0: i32) -> (i32, i32) {
    %c0_i32 = arith.constant 0 : i32
    %c0_i32_0 = arith.constant 0 : i32
    %c0_i32_1 = arith.constant 0 : i32
    return %c0_i32, %c0_i32_0 : i32, i32
  }
  func.func @transform_4(%arg0: i32) -> (i32, i32) {
    %c0_i32 = arith.constant 0 : i32
    %c0_i32_0 = arith.constant 0 : i32
    %c0_i32_1 = arith.constant 0 : i32
    return %c0_i32, %c0_i32_0 : i32, i32
  }
  func.func @transform_5(%arg0: i32) -> (i32, i32) {
    %c0_i32 = arith.constant 0 : i32
    %c0_i32_0 = arith.constant 0 : i32
    %c0_i32_1 = arith.constant 0 : i32
    return %c0_i32, %c0_i32_0 : i32, i32
  }
  func.func @transform_6(%arg0: i32) -> (i32, i32) {
    %c0_i32 = arith.constant 0 : i32
    %c0_i32_0 = arith.constant 0 : i32
    %c0_i32_1 = arith.constant 0 : i32
    return %c0_i32, %c0_i32_0 : i32, i32
  }
  func.func @transform_7(%arg0: i32) -> (i32, i32) {
    %c0_i32 = arith.constant 0 : i32
    %c0_i32_0 = arith.constant 0 : i32
    %c0_i32_1 = arith.constant 0 : i32
    return %c0_i32, %c0_i32_0 : i32, i32
  }
  func.func @transform_8(%arg0: i32) -> (i32, i32) {
    %c0_i32 = arith.constant 0 : i32
    %c0_i32_0 = arith.constant 0 : i32
    %c0_i32_1 = arith.constant 0 : i32
    return %c0_i32, %c0_i32_0 : i32, i32
  }
  func.func @transform_9(%arg0: i32) -> (i32, i32) {
    %c0_i32 = arith.constant 0 : i32
    %c0_i32_0 = arith.constant 0 : i32
    return %arg0, %c0_i32 : i32, i32
  }
}

</mosaic_0001>

<llo_original>
// kernel: simple_model_forward.1
$region0: #{simple_model_forward.1}
  #allocation0 [shape = 'u32[]', space=smem, size = 0x4, offset = 0x4, fixed_abs, tag = 'smem constant byte address 0x4 - core index']
  #allocation1 [shape = 'u32[144,128]{1,0:T(1,128)}', space=vmem, size = 0x12000, scoped, tag = 'internal scratch']
  %s0 = inlined_call_operand.vmem [shape: f32[64,32], index: 0, kind: input, shape index: {}]
  %s1 = inlined_call_operand.vmem [shape: bf16[32,64], index: 1, kind: input, shape index: {}]
  %s2 = inlined_call_operand.vmem [shape: f32[1,64], index: 2, kind: input, shape index: {}]
  %s3 = inlined_call_operand.hbm [shape: bf16[64,256], index: 3, kind: input, shape index: {}]
  %s4 = inlined_call_operand.vmem [shape: f32[1,256], index: 4, kind: input, shape index: {}]
  %s5 = inlined_call_operand.vmem [shape: bf16[256,128], index: 5, kind: input, shape index: {}]
  %s6 = inlined_call_operand.vmem [shape: f32[1,128], index: 6, kind: input, shape index: {}]
  %s7 = inlined_call_operand.vmem [shape: bf16[128,16], index: 7, kind: input, shape index: {}]
  %s8 = inlined_call_operand.vmem [shape: f32[1,16], index: 8, kind: input, shape index: {}]
  %s9 = inlined_call_operand.vmem [shape: f32[64,16], index: 9, kind: output, shape index: {}]
  %s10 = sld [smem:[#allocation0]]
  $region73: #{simple_model_forward.1} parent=0
    _
  %s12 = ssub.s32 1, %s10
  %s13 = scalar_select 0, %s12, %s10
  $region1: #{simple_model_forward.1} parent=0
    #allocation2 [shape = 'u8[32768]{0}', space=vmem, size = 0x8000, scoped, tag = 'input window, operand 3, single buffered']
    #allocation3 [shape = 's32[2]{0}', space=sflag, size = 0x8, scoped, tag = 'scoped memory for simple_model_forward.1']
    %14 = vsyncpa [#allocation3], 0
    loop: start=0, step=1, limit=4
    $region2: #{simple_model_forward.1} parent=1 // loop_pre_header
      _
    $region3: #{simple_model_forward.1} parent=1 // loop_header
      %s16 = sphi 0, %s20
      %p17 = scmp.ge.s32.totalorder %s16, 4
      %s26 = sphi 0, %s28
      %s29 = sphi 0, %s26
      %s30 = sphi 0, %s29
      %s46 = sphi 0, %s30
      %s50 = sphi 0, %s50
      %s52 = sphi 0, %s50
      %s53 = sphi 0, %s52
      %s67 = sphi 0, %s53
      %s71 = sphi 0, %s71
      %s73 = sphi 0, %s71
      %s74 = sphi 0, %s73
      %s88 = sphi 0, %s74
      %s92 = sphi 0, %s92
      %s94 = sphi 0, %s92
      %s95 = sphi 0, %s94
      %s109 = sphi 0, %s95
      %s113 = sphi 0, %s113
      %s115 = sphi 0, %s113
      %s116 = sphi 0, %s115
      %s130 = sphi 0, %s116
      %s134 = sphi 0, %s134
      %s136 = sphi 0, %s134
      %s137 = sphi 0, %s136
      %s151 = sphi 0, %s137
      %s155 = sphi 0, %s155
      %s157 = sphi 0, %s155
      %s158 = sphi 0, %s157
      %s172 = sphi 0, %s158
      %s176 = sphi 0, %s176
      %s178 = sphi 0, %s176
      %s179 = sphi 0, %s178
      %s193 = sphi 0, %s179
      %s197 = sphi 0, %s197
      %s199 = sphi 0, %s197
      %s200 = sphi 0, %s199
      %s214 = sphi 0, %s200
      %s220 = sphi 0, %s222
      %s223 = sphi 0, %s220
      %s224 = sphi 0, %s223
      %s240 = sphi 0, %s224
    $region4: #{simple_model_forward.1} parent=1 // loop_header_branch
      %19 = sbr.rel (%p17) target = $region8
    $region5: #{simple_model_forward.1} parent=1 // loop_body
      %s21 = ssub.s32 %s16, 1
      %s22 = ssub.s32 %s16, 2
      %s23 = sadd.s32 %s16, 1
      %s24 = ssub.s32 %s16, %s23
      %p25 = scmp.eq.s32.totalorder %s24, 0
      %s27 = sadd.s32 %s26, 1
      %s28 = scalar_select %p25, %s26, %s27
      %p31 = pneg %p25
      %p32 = scmp.eq.s32.totalorder %s16, 1
      %p33 = por %p31, %p32
      %p34 = scmp.ne.s32.totalorder %s26, %s29
      %p35 = scmp.eq.s32.totalorder %s16, 0
      %p36 = por %p34, %p35
      %p37 = scmp.ne.s32.totalorder %s26, %s29
      %p38 = scmp.eq.s32.totalorder %s21, 1
      %p39 = por %p37, %p38
      %p40 = scmp.ne.s32.totalorder %s29, %s30
      %p41 = scmp.eq.s32.totalorder %s21, 0
      %p42 = por %p40, %p41
      %p43 = scmp.ne.s32.totalorder %s29, %s30
      %p44 = scmp.eq.s32.totalorder %s22, 1
      %p45 = por %p43, %p44
      %p47 = scmp.ne.s32.totalorder %s30, %s46
      %p48 = scmp.eq.s32.totalorder %s22, 0
      %p49 = por %p47, %p48
      %s51 = sadd.s32 %s50, 1
      %p54 = scmp.eq.s32.totalorder %s16, 1
      %p55 = scmp.ne.s32.totalorder %s50, %s52
      %p56 = scmp.eq.s32.totalorder %s16, 0
      %p57 = por %p55, %p56
      %p58 = scmp.ne.s32.totalorder %s50, %s52
      %p59 = scmp.eq.s32.totalorder %s21, 1
      %p60 = por %p58, %p59
      %p61 = scmp.ne.s32.totalorder %s52, %s53
      %p62 = scmp.eq.s32.totalorder %s21, 0
      %p63 = por %p61, %p62
      %p64 = scmp.ne.s32.totalorder %s52, %s53
      %p65 = scmp.eq.s32.totalorder %s22, 1
      %p66 = por %p64, %p65
      %p68 = scmp.ne.s32.totalorder %s53, %s67
      %p69 = scmp.eq.s32.totalorder %s22, 0
      %p70 = por %p68, %p69
      %s72 = sadd.s32 %s71, 1
      %p75 = scmp.eq.s32.totalorder %s16, 1
      %p76 = scmp.ne.s32.totalorder %s71, %s73
      %p77 = scmp.eq.s32.totalorder %s16, 0
      %p78 = por %p76, %p77
      %p79 = scmp.ne.s32.totalorder %s71, %s73
      %p80 = scmp.eq.s32.totalorder %s21, 1
      %p81 = por %p79, %p80
      %p82 = scmp.ne.s32.totalorder %s73, %s74
      %p83 = scmp.eq.s32.totalorder %s21, 0
      %p84 = por %p82, %p83
      %p85 = scmp.ne.s32.totalorder %s73, %s74
      %p86 = scmp.eq.s32.totalorder %s22, 1
      %p87 = por %p85, %p86
      %p89 = scmp.ne.s32.totalorder %s74, %s88
      %p90 = scmp.eq.s32.totalorder %s22, 0
      %p91 = por %p89, %p90
      %s93 = sadd.s32 %s92, 1
      %p96 = scmp.eq.s32.totalorder %s16, 1
      %p97 = scmp.ne.s32.totalorder %s92, %s94
      %p98 = scmp.eq.s32.totalorder %s16, 0
      %p99 = por %p97, %p98
      %p100 = scmp.ne.s32.totalorder %s92, %s94
      %p101 = scmp.eq.s32.totalorder %s21, 1
      %p102 = por %p100, %p101
      %p103 = scmp.ne.s32.totalorder %s94, %s95
      %p104 = scmp.eq.s32.totalorder %s21, 0
      %p105 = por %p103, %p104
      %p106 = scmp.ne.s32.totalorder %s94, %s95
      %p107 = scmp.eq.s32.totalorder %s22, 1
      %p108 = por %p106, %p107
      %p110 = scmp.ne.s32.totalorder %s95, %s109
      %p111 = scmp.eq.s32.totalorder %s22, 0
      %p112 = por %p110, %p111
      %s114 = sadd.s32 %s113, 1
      %p117 = scmp.eq.s32.totalorder %s16, 1
      %p118 = scmp.ne.s32.totalorder %s113, %s115
      %p119 = scmp.eq.s32.totalorder %s16, 0
      %p120 = por %p118, %p119
      %p121 = scmp.ne.s32.totalorder %s113, %s115
      %p122 = scmp.eq.s32.totalorder %s21, 1
      %p123 = por %p121, %p122
      %p124 = scmp.ne.s32.totalorder %s115, %s116
      %p125 = scmp.eq.s32.totalorder %s21, 0
      %p126 = por %p124, %p125
      %p127 = scmp.ne.s32.totalorder %s115, %s116
      %p128 = scmp.eq.s32.totalorder %s22, 1
      %p129 = por %p127, %p128
      %p131 = scmp.ne.s32.totalorder %s116, %s130
      %p132 = scmp.eq.s32.totalorder %s22, 0
      %p133 = por %p131, %p132
      %s135 = sadd.s32 %s134, 1
      %p138 = scmp.eq.s32.totalorder %s16, 1
      %p139 = scmp.ne.s32.totalorder %s134, %s136
      %p140 = scmp.eq.s32.totalorder %s16, 0
      %p141 = por %p139, %p140
      %p142 = scmp.ne.s32.totalorder %s134, %s136
      %p143 = scmp.eq.s32.totalorder %s21, 1
      %p144 = por %p142, %p143
      %p145 = scmp.ne.s32.totalorder %s136, %s137
      %p146 = scmp.eq.s32.totalorder %s21, 0
      %p147 = por %p145, %p146
      %p148 = scmp.ne.s32.totalorder %s136, %s137
      %p149 = scmp.eq.s32.totalorder %s22, 1
      %p150 = por %p148, %p149
      %p152 = scmp.ne.s32.totalorder %s137, %s151
      %p153 = scmp.eq.s32.totalorder %s22, 0
      %p154 = por %p152, %p153
      %s156 = sadd.s32 %s155, 1
      %p159 = scmp.eq.s32.totalorder %s16, 1
      %p160 = scmp.ne.s32.totalorder %s155, %s157
      %p161 = scmp.eq.s32.totalorder %s16, 0
      %p162 = por %p160, %p161
      %p163 = scmp.ne.s32.totalorder %s155, %s157
      %p164 = scmp.eq.s32.totalorder %s21, 1
      %p165 = por %p163, %p164
      %p166 = scmp.ne.s32.totalorder %s157, %s158
      %p167 = scmp.eq.s32.totalorder %s21, 0
      %p168 = por %p166, %p167
      %p169 = scmp.ne.s32.totalorder %s157, %s158
      %p170 = scmp.eq.s32.totalorder %s22, 1
      %p171 = por %p169, %p170
      %p173 = scmp.ne.s32.totalorder %s158, %s172
      %p174 = scmp.eq.s32.totalorder %s22, 0
      %p175 = por %p173, %p174
      %s177 = sadd.s32 %s176, 1
      %p180 = scmp.eq.s32.totalorder %s16, 1
      %p181 = scmp.ne.s32.totalorder %s176, %s178
      %p182 = scmp.eq.s32.totalorder %s16, 0
      %p183 = por %p181, %p182
      %p184 = scmp.ne.s32.totalorder %s176, %s178
      %p185 = scmp.eq.s32.totalorder %s21, 1
      %p186 = por %p184, %p185
      %p187 = scmp.ne.s32.totalorder %s178, %s179
      %p188 = scmp.eq.s32.totalorder %s21, 0
      %p189 = por %p187, %p188
      %p190 = scmp.ne.s32.totalorder %s178, %s179
      %p191 = scmp.eq.s32.totalorder %s22, 1
      %p192 = por %p190, %p191
      %p194 = scmp.ne.s32.totalorder %s179, %s193
      %p195 = scmp.eq.s32.totalorder %s22, 0
      %p196 = por %p194, %p195
      %s198 = sadd.s32 %s197, 1
      %p201 = scmp.eq.s32.totalorder %s16, 1
      %p202 = scmp.ne.s32.totalorder %s197, %s199
      %p203 = scmp.eq.s32.totalorder %s16, 0
      %p204 = por %p202, %p203
      %p205 = scmp.ne.s32.totalorder %s197, %s199
      %p206 = scmp.eq.s32.totalorder %s21, 1
      %p207 = por %p205, %p206
      %p208 = scmp.ne.s32.totalorder %s199, %s200
      %p209 = scmp.eq.s32.totalorder %s21, 0
      %p210 = por %p208, %p209
      %p211 = scmp.ne.s32.totalorder %s199, %s200
      %p212 = scmp.eq.s32.totalorder %s22, 1
      %p213 = por %p211, %p212
      %p215 = scmp.ne.s32.totalorder %s200, %s214
      %p216 = scmp.eq.s32.totalorder %s22, 0
      %p217 = por %p215, %p216
      %s218 = ssub.s32 %s16, %s23
      %p219 = scmp.eq.s32.totalorder %s218, 0
      %s221 = sadd.s32 %s220, 1
      %s222 = scalar_select %p219, %s220, %s221
      %p225 = pneg %p219
      %p226 = scmp.eq.s32.totalorder %s16, 1
      %p227 = por %p225, %p226
      %p228 = scmp.ne.s32.totalorder %s220, %s223
      %p229 = scmp.eq.s32.totalorder %s16, 0
      %p230 = por %p228, %p229
      %p231 = scmp.ne.s32.totalorder %s220, %s223
      %p232 = scmp.eq.s32.totalorder %s21, 1
      %p233 = por %p231, %p232
      %p234 = scmp.ne.s32.totalorder %s223, %s224
      %p235 = scmp.eq.s32.totalorder %s21, 0
      %p236 = por %p234, %p235
      %p237 = scmp.ne.s32.totalorder %s223, %s224
      %p238 = scmp.eq.s32.totalorder %s22, 1
      %p239 = por %p237, %p238
      %p241 = scmp.ne.s32.totalorder %s224, %s240
      %p242 = scmp.eq.s32.totalorder %s22, 0
      %p243 = por %p241, %p242
      %p244 = scmp.le.s32.totalorder 1, %s16
      %p245 = scmp.lt.s32.totalorder %s16, 3
      %p246 = pnand %p244, %p245
      %p247 = pneg %p246
      // Predicated region
      $region9: #{simple_model_forward.1} parent=5 // pred_check
        _
      $region10: #{simple_model_forward.1} parent=5 // pred_check_branch
        %249 = sbr.rel (%p246) target = $region12
      $region11: #{simple_model_forward.1} parent=5 // pred_region
        %s250 = ssub.s32 %s16, 1
        // Predicated region
        $region13: #{simple_model_forward.1} parent=11 // pred_check
          %p251 = pneg %p63
        $region14: #{simple_model_forward.1} parent=11 // pred_check_branch
          %253 = sbr.rel (%p251) target = $region16
        $region15: #{simple_model_forward.1} parent=11 // pred_region
          _
        $region16: #{simple_model_forward.1} parent=11 // pred_fallthru
          _
        // Predicated region
        $region17: #{simple_model_forward.1} parent=11 // pred_check
          %p254 = pneg %p84
        $region18: #{simple_model_forward.1} parent=11 // pred_check_branch
          %256 = sbr.rel (%p254) target = $region20
        $region19: #{simple_model_forward.1} parent=11 // pred_region
          _
        $region20: #{simple_model_forward.1} parent=11 // pred_fallthru
          _
        // Predicated region
        $region21: #{simple_model_forward.1} parent=11 // pred_check
          %p257 = pneg %p105
        $region22: #{simple_model_forward.1} parent=11 // pred_check_branch
          %259 = sbr.rel (%p257) target = $region24
        $region23: #{simple_model_forward.1} parent=11 // pred_region
          %s261 = ssub.s32 1024, 1024
          %262 = vsyncadd [#allocation3], %s261
          %s263 = sshll.u32 [#allocation2], 4
          %s264 = int_to_ptr.vmem [resolvable:$true] %s263
          %269 = dma.hbm_to_vmem [thread:$0]  %s3, 1024, %s264, [#allocation3], 128, 128, 8
        $region24: #{simple_model_forward.1} parent=11 // pred_fallthru
          _
        // Predicated region
        $region25: #{simple_model_forward.1} parent=11 // pred_check
          %p270 = pneg %p126
        $region26: #{simple_model_forward.1} parent=11 // pred_check_branch
          %272 = sbr.rel (%p270) target = $region28
        $region27: #{simple_model_forward.1} parent=11 // pred_region
          _
        $region28: #{simple_model_forward.1} parent=11 // pred_fallthru
          _
        // Predicated region
        $region29: #{simple_model_forward.1} parent=11 // pred_check
          %p273 = pneg %p147
        $region30: #{simple_model_forward.1} parent=11 // pred_check_branch
          %275 = sbr.rel (%p273) target = $region32
        $region31: #{simple_model_forward.1} parent=11 // pred_region
          _
        $region32: #{simple_model_forward.1} parent=11 // pred_fallthru
          _
        // Predicated region
        $region33: #{simple_model_forward.1} parent=11 // pred_check
          %p276 = pneg %p168
        $region34: #{simple_model_forward.1} parent=11 // pred_check_branch
          %278 = sbr.rel (%p276) target = $region36
        $region35: #{simple_model_forward.1} parent=11 // pred_region
          _
        $region36: #{simple_model_forward.1} parent=11 // pred_fallthru
          _
        // Predicated region
        $region37: #{simple_model_forward.1} parent=11 // pred_check
          %p279 = pneg %p189
        $region38: #{simple_model_forward.1} parent=11 // pred_check_branch
          %281 = sbr.rel (%p279) target = $region40
        $region39: #{simple_model_forward.1} parent=11 // pred_region
          _
        $region40: #{simple_model_forward.1} parent=11 // pred_fallthru
          _
        // Predicated region
        $region41: #{simple_model_forward.1} parent=11 // pred_check
          %p282 = pneg %p210
        $region42: #{simple_model_forward.1} parent=11 // pred_check_branch
          %284 = sbr.rel (%p282) target = $region44
        $region43: #{simple_model_forward.1} parent=11 // pred_region
          _
        $region44: #{simple_model_forward.1} parent=11 // pred_fallthru
          _
      $region12: #{simple_model_forward.1} parent=5 // pred_fallthru
        _
      %p285 = scmp.lt.s32.totalorder %s16, 2
      // Predicated region
      $region45: #{simple_model_forward.1} parent=5 // pred_check
        %p286 = pneg %p285
      $region46: #{simple_model_forward.1} parent=5 // pred_check_branch
        %288 = sbr.rel (%p286) target = $region48
      $region47: #{simple_model_forward.1} parent=5 // pred_region
        // Predicated region
        $region49: #{simple_model_forward.1} parent=47 // pred_check
          %p289 = pneg %p36
        $region50: #{simple_model_forward.1} parent=47 // pred_check_branch
          %291 = sbr.rel (%p289) target = $region52
        $region51: #{simple_model_forward.1} parent=47 // pred_region
          %s292 = smul.u32 4, %s16
          %p293 = scmp.lt.s32.totalorder %s292, 7
          %s294 = scalar_select %p293, %s292, 7
          %s295 = smul.addr %s294, 8
          %s296 = scalar_lea.vmem %s0, %s295
          %s297 = smul.u32 4, %s16
        $region52: #{simple_model_forward.1} parent=47 // pred_fallthru
          _
      $region48: #{simple_model_forward.1} parent=5 // pred_fallthru
        _
      %p298 = scmp.le.s32.totalorder 1, %s16
      %p299 = scmp.lt.s32.totalorder %s16, 3
      %p300 = pnand %p298, %p299
      %p301 = pneg %p300
      // Predicated region
      $region53: #{simple_model_forward.1} parent=5 // pred_check
        _
      $region54: #{simple_model_forward.1} parent=5 // pred_check_branch
        %303 = sbr.rel (%p300) target = $region56
      $region55: #{simple_model_forward.1} parent=5 // pred_region
        %s304 = ssub.s32 %s16, 1
        // Predicated region
        $region57: #{simple_model_forward.1} parent=55 // pred_check
          %p305 = pneg %p105
        $region58: #{simple_model_forward.1} parent=55 // pred_check_branch
          %307 = sbr.rel (%p305) target = $region60
        $region59: #{simple_model_forward.1} parent=55 // pred_region
          %308 = dma.done [#allocation3], 1024
        $region60: #{simple_model_forward.1} parent=55 // pred_fallthru
          _
        %s309 = smul.u32 4, %s21
        %p310 = scmp.lt.s32.totalorder %s309, 7
        %s311 = scalar_select %p310, %s309, 7
        %s312 = smul.addr %s311, 8
        %s313 = scalar_lea.vmem %s0, %s312
        %p314 = pneg %p42
        %p315 = pneg %p39
        %p316 = pneg %p63
        %p317 = pneg %p60
        %p318 = pneg %p84
        %p319 = pneg %p81
        %p320 = pneg %p105
        %p321 = pneg %p102
        %p322 = pneg %p126
        %p323 = pneg %p123
        %p324 = pneg %p147
        %p325 = pneg %p144
        %p326 = pneg %p168
        %p327 = pneg %p165
        %p328 = pneg %p189
        %p329 = pneg %p186
        %p330 = pneg %p210
        %p331 = pneg %p207
        %p332 = pneg %p236
        %p333 = pneg %p233
        %s334 = smul.u32 4, %s21
        %p335 = scmp.lt.s32.totalorder %s334, 7
        %s336 = scalar_select %p335, %s334, 7
        %s337 = smul.addr %s336, 8
        %s338 = scalar_lea.vmem %s9, %s337
        %s339 = smul.u32 4, %s21
        %p340 = scmp.lt.s32.totalorder %s339, 7
        %s341 = scalar_select %p340, %s339, 7
        %s342 = smul.addr %s341, 8
        %s343 = scalar_lea.vmem %s0, %s342
        %s344 = smul.u32 4, %s21
        %s345 = smul.u32 4, %s21
        %p346 = scmp.lt.s32.totalorder %s345, 7
        %s347 = scalar_select %p346, %s345, 7
        %s348 = smul.addr %s347, 8
        %s349 = scalar_lea.vmem %s9, %s348
        %s350 = smul.u32 4, %s21
        %v352 = vld [vmem:[%s343] sm:$0xff]
        %v353 = vld [vmem:[%s343 + $0x8] sm:$0xff]
        %v354 = vld [vmem:[%s343 + $0x10] sm:$0xff]
        %v355 = vld [vmem:[%s343 + $0x18] sm:$0xff]
        %v356 = vpack.c.bf16 %v353, %v352
        %v357 = vpack.c.bf16 %v355, %v354
        %v358 = vld [vmem:[%s1] sm:$0xf]
        %v359 = vld [vmem:[%s1 + $0x4] sm:$0xf]
        %v360 = vld [vmem:[%s1 + $0x8] sm:$0xf]
        %v361 = vld [vmem:[%s1 + $0xc] sm:$0xf]
        %v362 = vld [vmem:[%s2] sm:$0x1]
        %v364 = vlaneseq
        %v365 = vshrl.u32 %v364, 7
        %v366 = vsub.s32 0, %v365
        %v367 = vrot.slane %v362, %v366
        %v373 = vunpack.c.l.b16 %v358
        %v374 = vunpack.c.l.b16 %v359
        %v375 = vunpack.c.l.b16 %v360
        %v376 = vunpack.c.l.b16 %v361
        %v377 = vpack.c.b16 %v374, %v373
        %v378 = vpack.c.b16 %v376, %v375
        %vm381 = vcmask 261120
        %v383 = vsel %vm381, %v356, 0
        %v386 = vsel %vm381, %v357, 0
        %388 = vmatprep.subr.bf16.mxu0 0
        %389 = vmatpush1.bf16.msra.mxu0 0
        %390 = vmatprep.subr.bf16.mxu0 0
        %391 = vmatpush1.bf16.msra.mxu0 0
        %392 = vmatprep.subr.bf16.mxu0 0
        %393 = vmatpush1.bf16.msra.mxu0 0
        %394 = vmatprep.subr.bf16.mxu0 0
        %395 = vmatpush1.bf16.msra.mxu0 0
        %396 = vmatprep.subr.bf16.mxu0 0
        %397 = vmatpush1.bf16.msra.mxu0 0
        %398 = vmatprep.subr.bf16.mxu0 0
        %399 = vmatpush1.bf16.msra.mxu0 0
        %400 = vmatprep.subr.bf16.mxu0 0
        %401 = vmatpush1.bf16.msra.mxu0 %v378
        %402 = vmatprep.subr.bf16.mxu0 0
        %403 = vmatpush1.bf16.msra.mxu0 %v377
        %404 = vmatprep.subr.bf16.mxu0 0
        %405 = vmatpush2.bf16.msra.mxu0 0
        %406 = vmatprep.subr.bf16.mxu0 0
        %407 = vmatpush2.bf16.msra.mxu0 0
        %408 = vmatprep.subr.bf16.mxu0 0
        %409 = vmatpush2.bf16.msra.mxu0 0
        %410 = vmatprep.subr.bf16.mxu0 0
        %411 = vmatpush2.bf16.msra.mxu0 0
        %412 = vmatprep.subr.bf16.mxu0 0
        %413 = vmatpush2.bf16.msra.mxu0 0
        %414 = vmatprep.subr.bf16.mxu0 0
        %415 = vmatpush2.bf16.msra.mxu0 0
        %416 = vmatprep.subr.bf16.mxu0 0
        %417 = vmatpush2.bf16.msra.mxu0 0
        %418 = vmatprep.subr.bf16.mxu0 0
        %419 = vmatpush2.bf16.msra.mxu0 0
        %420 = vmatprep.mubr.bf16.mxu0 0
        %421 = vmatmul.mubr.bf16.gmra.mxu0 %v383
        %v422 = vpop.f32.mrf.mxu0
        %v423 = vadd.f32 %v367, %v422
        %v424 = vpop.f32.mrf.mxu0
        %v425 = vpop.f32.mrf.mxu0
        %v426 = vadd.f32 %v367, %v425
        %v427 = vpop.f32.mrf.mxu0
        %428 = vmatprep.mubr.bf16.mxu0 0
        %429 = vmatmul.mubr.bf16.gmra.mxu0 %v386
        %v430 = vpop.f32.mrf.mxu0
        %v431 = vadd.f32 %v367, %v430
        %v432 = vpop.f32.mrf.mxu0
        %v433 = vpop.f32.mrf.mxu0
        %v434 = vadd.f32 %v367, %v433
        %v435 = vpop.f32.mrf.mxu0
        %436 = vdwg.mxu0
        %v437 = vmax.f32 %v423, 0.0
        %v438 = vmax.f32 %v426, 0.0
        %v439 = vmax.f32 %v431, 0.0
        %v440 = vmax.f32 %v434, 0.0
        %v441 = vpack.c.bf16 %v438, %v437
        %v442 = vpack.c.bf16 %v440, %v439
        %v443 = vld [vmem:[#allocation2] sm:$0xff]
        %v444 = vld [vmem:[#allocation2 + $0x8] sm:$0xff]
        %v445 = vld [vmem:[#allocation2 + $0x10] sm:$0xff]
        %v446 = vld [vmem:[#allocation2 + $0x18] sm:$0xff]
        %v447 = vld [vmem:[#allocation2 + $0x20] sm:$0xff]
        %v448 = vld [vmem:[#allocation2 + $0x28] sm:$0xff]
        %v449 = vld [vmem:[#allocation2 + $0x30] sm:$0xff]
        %v450 = vld [vmem:[#allocation2 + $0x38] sm:$0xff]
        %v451 = vld [vmem:[%s4] sm:$0x3]
        %v453 = vlaneseq
        %v454 = vshrl.u32 %v453, 7
        %v455 = vsub.s32 0, %v454
        %v456 = vrot.slane %v451, %v455
        %v457 = vlaneseq
        %v458 = vshrl.u32 %v457, 7
        %v459 = vsub.s32 1, %v458
        %v460 = vrot.slane %v451, %v459
        %v471 = vunpack.c.l.b16 %v443
        %v472 = vunpack.c.h.b16 %v443
        %v473 = vunpack.c.l.b16 %v444
        %v474 = vunpack.c.h.b16 %v444
        %v475 = vunpack.c.l.b16 %v445
        %v476 = vunpack.c.h.b16 %v445
        %v477 = vunpack.c.l.b16 %v446
        %v478 = vunpack.c.h.b16 %v446
        %v479 = vunpack.c.l.b16 %v447
        %v480 = vunpack.c.h.b16 %v447
        %v481 = vunpack.c.l.b16 %v448
        %v482 = vunpack.c.h.b16 %v448
        %v483 = vunpack.c.l.b16 %v449
        %v484 = vunpack.c.h.b16 %v449
        %v485 = vunpack.c.l.b16 %v450
        %v486 = vunpack.c.h.b16 %v450
        %v487 = vpack.c.b16 %v473, %v471
        %v488 = vpack.c.b16 %v474, %v472
        %v489 = vpack.c.b16 %v477, %v475
        %v490 = vpack.c.b16 %v478, %v476
        %v491 = vpack.c.b16 %v481, %v479
        %v492 = vpack.c.b16 %v482, %v480
        %v493 = vpack.c.b16 %v485, %v483
        %v494 = vpack.c.b16 %v486, %v484
        %vm503 = vcmask 523264
        %v505 = vsel %vm503, %v441, 0
        %v508 = vsel %vm503, %v442, 0
        %510 = vmatprep.subr.bf16.mxu0 0
        %511 = vmatpush1.bf16.msra.mxu0 0
        %512 = vmatprep.subr.bf16.mxu0 0
        %513 = vmatpush1.bf16.msra.mxu0 0
        %514 = vmatprep.subr.bf16.mxu0 0
        %515 = vmatpush1.bf16.msra.mxu0 0
        %516 = vmatprep.subr.bf16.mxu0 0
        %517 = vmatpush1.bf16.msra.mxu0 0
        %518 = vmatprep.subr.bf16.mxu0 %v494
        %519 = vmatpush1.bf16.msra.mxu0 %v493
        %520 = vmatprep.subr.bf16.mxu0 %v492
        %521 = vmatpush1.bf16.msra.mxu0 %v491
        %522 = vmatprep.subr.bf16.mxu0 %v490
        %523 = vmatpush1.bf16.msra.mxu0 %v489
        %524 = vmatprep.subr.bf16.mxu0 %v488
        %525 = vmatpush1.bf16.msra.mxu0 %v487
        %526 = vmatprep.subr.bf16.mxu0 0
        %527 = vmatpush2.bf16.msra.mxu0 0
        %528 = vmatprep.subr.bf16.mxu0 0
        %529 = vmatpush2.bf16.msra.mxu0 0
        %530 = vmatprep.subr.bf16.mxu0 0
        %531 = vmatpush2.bf16.msra.mxu0 0
        %532 = vmatprep.subr.bf16.mxu0 0
        %533 = vmatpush2.bf16.msra.mxu0 0
        %534 = vmatprep.subr.bf16.mxu0 0
        %535 = vmatpush2.bf16.msra.mxu0 0
        %536 = vmatprep.subr.bf16.mxu0 0
        %537 = vmatpush2.bf16.msra.mxu0 0
        %538 = vmatprep.subr.bf16.mxu0 0
        %539 = vmatpush2.bf16.msra.mxu0 0
        %540 = vmatprep.subr.bf16.mxu0 0
        %541 = vmatpush2.bf16.msra.mxu0 0
        %542 = vmatprep.mubr.bf16.mxu0 0
        %543 = vmatmul.mubr.bf16.gmra.mxu0 %v505
        %v544 = vpop.f32.mrf.mxu0
        %v545 = vadd.f32 %v456, %v544
        %v546 = vpop.f32.mrf.mxu0
        %v547 = vadd.f32 %v460, %v546
        %v548 = vpop.f32.mrf.mxu0
        %v549 = vadd.f32 %v456, %v548
        %v550 = vpop.f32.mrf.mxu0
        %v551 = vadd.f32 %v460, %v550
        %552 = vmatprep.mubr.bf16.mxu0 0
        %553 = vmatmul.mubr.bf16.gmra.mxu0 %v508
        %v554 = vpop.f32.mrf.mxu0
        %v555 = vadd.f32 %v456, %v554
        %v556 = vpop.f32.mrf.mxu0
        %v557 = vadd.f32 %v460, %v556
        %v558 = vpop.f32.mrf.mxu0
        %v559 = vadd.f32 %v456, %v558
        %v560 = vpop.f32.mrf.mxu0
        %v561 = vadd.f32 %v460, %v560
        %562 = vdwg.mxu0
        %v563 = vmax.f32 %v545, 0.0
        %v564 = vmax.f32 %v547, 0.0
        %v565 = vmax.f32 %v549, 0.0
        %v566 = vmax.f32 %v551, 0.0
        %v567 = vmax.f32 %v555, 0.0
        %v568 = vmax.f32 %v557, 0.0
        %v569 = vmax.f32 %v559, 0.0
        %v570 = vmax.f32 %v561, 0.0
        %v571 = vpack.c.bf16 %v565, %v563
        %v572 = vpack.c.bf16 %v566, %v564
        %v573 = vpack.c.bf16 %v569, %v567
        %v574 = vpack.c.bf16 %v570, %v568
        %v575 = vld [vmem:[%s5] sm:$0xf]
        %v576 = vld [vmem:[%s5 + $0x4] sm:$0xf]
        %v577 = vld [vmem:[%s5 + $0x8] sm:$0xf]
        %v578 = vld [vmem:[%s5 + $0xc] sm:$0xf]
        %v579 = vld [vmem:[%s5 + $0x10] sm:$0xf]
        %v580 = vld [vmem:[%s5 + $0x14] sm:$0xf]
        %v581 = vld [vmem:[%s5 + $0x18] sm:$0xf]
        %v582 = vld [vmem:[%s5 + $0x1c] sm:$0xf]
        %v583 = vld [vmem:[%s5 + $0x20] sm:$0xf]
        %v584 = vld [vmem:[%s5 + $0x24] sm:$0xf]
        %v585 = vld [vmem:[%s5 + $0x28] sm:$0xf]
        %v586 = vld [vmem:[%s5 + $0x2c] sm:$0xf]
        %v587 = vld [vmem:[%s5 + $0x30] sm:$0xf]
        %v588 = vld [vmem:[%s5 + $0x34] sm:$0xf]
        %v589 = vld [vmem:[%s5 + $0x38] sm:$0xf]
        %v590 = vld [vmem:[%s5 + $0x3c] sm:$0xf]
        %v591 = vld [vmem:[%s5 + $0x40] sm:$0xf]
        %v592 = vld [vmem:[%s5 + $0x44] sm:$0xf]
        %v593 = vld [vmem:[%s5 + $0x48] sm:$0xf]
        %v594 = vld [vmem:[%s5 + $0x4c] sm:$0xf]
        %v595 = vld [vmem:[%s5 + $0x50] sm:$0xf]
        %v596 = vld [vmem:[%s5 + $0x54] sm:$0xf]
        %v597 = vld [vmem:[%s5 + $0x58] sm:$0xf]
        %v598 = vld [vmem:[%s5 + $0x5c] sm:$0xf]
        %v599 = vld [vmem:[%s5 + $0x60] sm:$0xf]
        %v600 = vld [vmem:[%s5 + $0x64] sm:$0xf]
        %v601 = vld [vmem:[%s5 + $0x68] sm:$0xf]
        %v602 = vld [vmem:[%s5 + $0x6c] sm:$0xf]
        %v603 = vld [vmem:[%s5 + $0x70] sm:$0xf]
        %v604 = vld [vmem:[%s5 + $0x74] sm:$0xf]
        %v605 = vld [vmem:[%s5 + $0x78] sm:$0xf]
        %v606 = vld [vmem:[%s5 + $0x7c] sm:$0xf]
        %v607 = vld [vmem:[%s6] sm:$0x1]
        %v609 = vlaneseq
        %v610 = vshrl.u32 %v609, 7
        %v611 = vsub.s32 0, %v610
        %v612 = vrot.slane %v607, %v611
        %v646 = vunpack.c.l.b16 %v575
        %v647 = vunpack.c.l.b16 %v576
        %v648 = vunpack.c.l.b16 %v577
        %v649 = vunpack.c.l.b16 %v578
        %v650 = vunpack.c.l.b16 %v579
        %v651 = vunpack.c.l.b16 %v580
        %v652 = vunpack.c.l.b16 %v581
        %v653 = vunpack.c.l.b16 %v582
        %v654 = vunpack.c.l.b16 %v583
        %v655 = vunpack.c.l.b16 %v584
        %v656 = vunpack.c.l.b16 %v585
        %v657 = vunpack.c.l.b16 %v586
        %v658 = vunpack.c.l.b16 %v587
        %v659 = vunpack.c.l.b16 %v588
        %v660 = vunpack.c.l.b16 %v589
        %v661 = vunpack.c.l.b16 %v590
        %v662 = vunpack.c.l.b16 %v591
        %v663 = vunpack.c.l.b16 %v592
        %v664 = vunpack.c.l.b16 %v593
        %v665 = vunpack.c.l.b16 %v594
        %v666 = vunpack.c.l.b16 %v595
        %v667 = vunpack.c.l.b16 %v596
        %v668 = vunpack.c.l.b16 %v597
        %v669 = vunpack.c.l.b16 %v598
        %v670 = vunpack.c.l.b16 %v599
        %v671 = vunpack.c.l.b16 %v600
        %v672 = vunpack.c.l.b16 %v601
        %v673 = vunpack.c.l.b16 %v602
        %v674 = vunpack.c.l.b16 %v603
        %v675 = vunpack.c.l.b16 %v604
        %v676 = vunpack.c.l.b16 %v605
        %v677 = vunpack.c.l.b16 %v606
        %v678 = vpack.c.b16 %v647, %v646
        %v679 = vpack.c.b16 %v649, %v648
        %v680 = vpack.c.b16 %v651, %v650
        %v681 = vpack.c.b16 %v653, %v652
        %v682 = vpack.c.b16 %v655, %v654
        %v683 = vpack.c.b16 %v657, %v656
        %v684 = vpack.c.b16 %v659, %v658
        %v685 = vpack.c.b16 %v661, %v660
        %v686 = vpack.c.b16 %v663, %v662
        %v687 = vpack.c.b16 %v665, %v664
        %v688 = vpack.c.b16 %v667, %v666
        %v689 = vpack.c.b16 %v669, %v668
        %v690 = vpack.c.b16 %v671, %v670
        %v691 = vpack.c.b16 %v673, %v672
        %v692 = vpack.c.b16 %v675, %v674
        %v693 = vpack.c.b16 %v677, %v676
        %710 = vmatprep.subr.bf16.mxu0 0
        %711 = vmatpush1.bf16.msra.mxu0 %v685
        %712 = vmatprep.subr.bf16.mxu0 0
        %713 = vmatpush1.bf16.msra.mxu0 %v684
        %714 = vmatprep.subr.bf16.mxu0 0
        %715 = vmatpush1.bf16.msra.mxu0 %v683
        %716 = vmatprep.subr.bf16.mxu0 0
        %717 = vmatpush1.bf16.msra.mxu0 %v682
        %718 = vmatprep.subr.bf16.mxu0 0
        %719 = vmatpush1.bf16.msra.mxu0 %v681
        %720 = vmatprep.subr.bf16.mxu0 0
        %721 = vmatpush1.bf16.msra.mxu0 %v680
        %722 = vmatprep.subr.bf16.mxu0 0
        %723 = vmatpush1.bf16.msra.mxu0 %v679
        %724 = vmatprep.subr.bf16.mxu0 0
        %725 = vmatpush1.bf16.msra.mxu0 %v678
        %726 = vmatprep.subr.bf16.mxu0 0
        %727 = vmatpush2.bf16.msra.mxu0 %v693
        %728 = vmatprep.subr.bf16.mxu0 0
        %729 = vmatpush2.bf16.msra.mxu0 %v692
        %730 = vmatprep.subr.bf16.mxu0 0
        %731 = vmatpush2.bf16.msra.mxu0 %v691
        %732 = vmatprep.subr.bf16.mxu0 0
        %733 = vmatpush2.bf16.msra.mxu0 %v690
        %734 = vmatprep.subr.bf16.mxu0 0
        %735 = vmatpush2.bf16.msra.mxu0 %v689
        %736 = vmatprep.subr.bf16.mxu0 0
        %737 = vmatpush2.bf16.msra.mxu0 %v688
        %738 = vmatprep.subr.bf16.mxu0 0
        %739 = vmatpush2.bf16.msra.mxu0 %v687
        %740 = vmatprep.subr.bf16.mxu0 0
        %741 = vmatpush2.bf16.msra.mxu0 %v686
        %742 = vmatprep.mubr.bf16.mxu0 %v572
        %743 = vmatmul.mubr.bf16.gmra.mxu0 %v571
        %v744 = vpop.f32.mrf.mxu0
        %v745 = vadd.f32 %v612, %v744
        %v746 = vpop.f32.mrf.mxu0
        %v747 = vpop.f32.mrf.mxu0
        %v748 = vadd.f32 %v612, %v747
        %v749 = vpop.f32.mrf.mxu0
        %750 = vmatprep.mubr.bf16.mxu0 %v574
        %751 = vmatmul.mubr.bf16.gmra.mxu0 %v573
        %v752 = vpop.f32.mrf.mxu0
        %v753 = vadd.f32 %v612, %v752
        %v754 = vpop.f32.mrf.mxu0
        %v755 = vpop.f32.mrf.mxu0
        %v756 = vadd.f32 %v612, %v755
        %v757 = vpop.f32.mrf.mxu0
        %758 = vdwg.mxu0
        %v759 = vmax.f32 %v745, 0.0
        %v760 = vmax.f32 %v748, 0.0
        %v761 = vmax.f32 %v753, 0.0
        %v762 = vmax.f32 %v756, 0.0
        %v763 = vpack.c.bf16 %v760, %v759
        %v764 = vpack.c.bf16 %v762, %v761
        %v765 = vld [vmem:[%s7] sm:$0xf]
        %v766 = vld [vmem:[%s7 + $0x4] sm:$0xf]
        %v767 = vld [vmem:[%s7 + $0x8] sm:$0xf]
        %v768 = vld [vmem:[%s7 + $0xc] sm:$0xf]
        %v769 = vld [vmem:[%s7 + $0x10] sm:$0xf]
        %v770 = vld [vmem:[%s7 + $0x14] sm:$0xf]
        %v771 = vld [vmem:[%s7 + $0x18] sm:$0xf]
        %v772 = vld [vmem:[%s7 + $0x1c] sm:$0xf]
        %v773 = vld [vmem:[%s7 + $0x20] sm:$0xf]
        %v774 = vld [vmem:[%s7 + $0x24] sm:$0xf]
        %v775 = vld [vmem:[%s7 + $0x28] sm:$0xf]
        %v776 = vld [vmem:[%s7 + $0x2c] sm:$0xf]
        %v777 = vld [vmem:[%s7 + $0x30] sm:$0xf]
        %v778 = vld [vmem:[%s7 + $0x34] sm:$0xf]
        %v779 = vld [vmem:[%s7 + $0x38] sm:$0xf]
        %v780 = vld [vmem:[%s7 + $0x3c] sm:$0xf]
        %v781 = vld [vmem:[%s8] sm:$0x1]
        %v783 = vlaneseq
        %v784 = vshrl.u32 %v783, 7
        %v785 = vsub.s32 0, %v784
        %v786 = vrot.slane %v781, %v785
        %v804 = vunpack.c.l.b16 %v765
        %v805 = vunpack.c.l.b16 %v766
        %v806 = vunpack.c.l.b16 %v767
        %v807 = vunpack.c.l.b16 %v768
        %v808 = vunpack.c.l.b16 %v769
        %v809 = vunpack.c.l.b16 %v770
        %v810 = vunpack.c.l.b16 %v771
        %v811 = vunpack.c.l.b16 %v772
        %v812 = vunpack.c.l.b16 %v773
        %v813 = vunpack.c.l.b16 %v774
        %v814 = vunpack.c.l.b16 %v775
        %v815 = vunpack.c.l.b16 %v776
        %v816 = vunpack.c.l.b16 %v777
        %v817 = vunpack.c.l.b16 %v778
        %v818 = vunpack.c.l.b16 %v779
        %v819 = vunpack.c.l.b16 %v780
        %v820 = vpack.c.b16 %v805, %v804
        %v821 = vpack.c.b16 %v807, %v806
        %v822 = vpack.c.b16 %v809, %v808
        %v823 = vpack.c.b16 %v811, %v810
        %v824 = vpack.c.b16 %v813, %v812
        %v825 = vpack.c.b16 %v815, %v814
        %v826 = vpack.c.b16 %v817, %v816
        %v827 = vpack.c.b16 %v819, %v818
        %836 = vmatprep.subr.bf16.mxu0 0
        %837 = vmatpush1.bf16.msra.mxu0 %v827
        %838 = vmatprep.subr.bf16.mxu0 0
        %839 = vmatpush1.bf16.msra.mxu0 %v826
        %840 = vmatprep.subr.bf16.mxu0 0
        %841 = vmatpush1.bf16.msra.mxu0 %v825
        %842 = vmatprep.subr.bf16.mxu0 0
        %843 = vmatpush1.bf16.msra.mxu0 %v824
        %844 = vmatprep.subr.bf16.mxu0 0
        %845 = vmatpush1.bf16.msra.mxu0 %v823
        %846 = vmatprep.subr.bf16.mxu0 0
        %847 = vmatpush1.bf16.msra.mxu0 %v822
        %848 = vmatprep.subr.bf16.mxu0 0
        %849 = vmatpush1.bf16.msra.mxu0 %v821
        %850 = vmatprep.subr.bf16.mxu0 0
        %851 = vmatpush1.bf16.msra.mxu0 %v820
        %852 = vmatprep.subr.bf16.mxu0 0
        %853 = vmatpush2.bf16.msra.mxu0 0
        %854 = vmatprep.subr.bf16.mxu0 0
        %855 = vmatpush2.bf16.msra.mxu0 0
        %856 = vmatprep.subr.bf16.mxu0 0
        %857 = vmatpush2.bf16.msra.mxu0 0
        %858 = vmatprep.subr.bf16.mxu0 0
        %859 = vmatpush2.bf16.msra.mxu0 0
        %860 = vmatprep.subr.bf16.mxu0 0
        %861 = vmatpush2.bf16.msra.mxu0 0
        %862 = vmatprep.subr.bf16.mxu0 0
        %863 = vmatpush2.bf16.msra.mxu0 0
        %864 = vmatprep.subr.bf16.mxu0 0
        %865 = vmatpush2.bf16.msra.mxu0 0
        %866 = vmatprep.subr.bf16.mxu0 0
        %867 = vmatpush2.bf16.msra.mxu0 0
        %868 = vmatprep.mubr.bf16.mxu0 0
        %869 = vmatmul.mubr.bf16.gmra.mxu0 %v763
        %v870 = vpop.f32.mrf.mxu0
        %v871 = vadd.f32 %v786, %v870
        %v872 = vpop.f32.mrf.mxu0
        %v873 = vpop.f32.mrf.mxu0
        %v874 = vadd.f32 %v786, %v873
        %v875 = vpop.f32.mrf.mxu0
        %876 = vmatprep.mubr.bf16.mxu0 0
        %877 = vmatmul.mubr.bf16.gmra.mxu0 %v764
        %v878 = vpop.f32.mrf.mxu0
        %v879 = vadd.f32 %v786, %v878
        %v880 = vpop.f32.mrf.mxu0
        %v881 = vpop.f32.mrf.mxu0
        %v882 = vadd.f32 %v786, %v881
        %v883 = vpop.f32.mrf.mxu0
        %884 = vdwg.mxu0
        %vm885 = vcmask 130048
        %886 = vst.msk [vmem:[%s349] sm:$0xff] %vm885, %v871
        %887 = vst.msk [vmem:[%s349 + $0x8] sm:$0xff] %vm885, %v874
        %888 = vst.msk [vmem:[%s349 + $0x10] sm:$0xff] %vm885, %v879
        %889 = vst.msk [vmem:[%s349 + $0x18] sm:$0xff] %vm885, %v882
        %s890 = smul.u32 4, %s21
        %p891 = scmp.lt.s32.totalorder %s890, 7
        %s892 = scalar_select %p891, %s890, 7
        %s893 = smul.addr %s892, 8
        %s894 = scalar_lea.vmem %s9, %s893
        // Predicated region
        $region61: #{simple_model_forward.1} parent=55 // pred_check
          %p895 = pneg %p233
        $region62: #{simple_model_forward.1} parent=55 // pred_check_branch
          %897 = sbr.rel (%p895) target = $region64
        $region63: #{simple_model_forward.1} parent=55 // pred_region
          %s898 = smul.u32 4, %s21
        $region64: #{simple_model_forward.1} parent=55 // pred_fallthru
          _
      $region56: #{simple_model_forward.1} parent=5 // pred_fallthru
        _
      %p899 = scmp.le.s32.totalorder 2, %s16
      // Predicated region
      $region65: #{simple_model_forward.1} parent=5 // pred_check
        %p900 = pneg %p899
      $region66: #{simple_model_forward.1} parent=5 // pred_check_branch
        %902 = sbr.rel (%p900) target = $region68
      $region67: #{simple_model_forward.1} parent=5 // pred_region
        %s903 = ssub.s32 %s16, 2
        // Predicated region
        $region69: #{simple_model_forward.1} parent=67 // pred_check
          %p904 = pneg %p239
        $region70: #{simple_model_forward.1} parent=67 // pred_check_branch
          %906 = sbr.rel (%p904) target = $region72
        $region71: #{simple_model_forward.1} parent=67 // pred_region
          %s907 = smul.u32 4, %s22
          %p908 = scmp.lt.s32.totalorder %s907, 7
          %s909 = scalar_select %p908, %s907, 7
          %s910 = smul.addr %s909, 8
          %s911 = scalar_lea.vmem %s9, %s910
        $region72: #{simple_model_forward.1} parent=67 // pred_fallthru
          _
      $region68: #{simple_model_forward.1} parent=5 // pred_fallthru
        _
    $region6: #{simple_model_forward.1} parent=1 // loop_footer
      %s20 = sadd.s32 1, %s16
    $region7: #{simple_model_forward.1} parent=1 // loop_footer_branch
      %15 = sbr.rel target = $region3
    $region8: #{simple_model_forward.1} parent=1 // loop_exit
      _
    %912 = vsyncpa [#allocation3], 1
    %s913 = scalar_lea.sflag [#allocation3], 1
    %914 = vsyncpa %s913, 1

</llo_original>
